<compile_context>
chip_gen: v5e
topology: v5e:2x2
jax: 0.10.0
libtpu: 0.0.40
codegen_flags: <defaults>
</compile_context>

<pallas_src>
import jax
import jax.numpy as jnp
from jax import lax
from jax.experimental import pallas as pl
from jax.experimental.pallas import tpu as pltpu


def rnn_forecast_kernel(x_ref, w_ih_ref, w_hh_ref, b_ih_ref, b_hh_ref,
                        w_fc_ref, b_fc_ref, out_ref, xw_ref):
    """Single-invocation kernel: whole sequence + weights resident in VMEM.

    x_ref:    (T*B, D) time-major flattened input (rows [t0b0, t0b1, t1b0, ...])
    w_ih_ref: (H, D)   PyTorch nn.RNN weight_ih_l0 layout (no transpose)
    w_hh_ref: (H, H)   PyTorch nn.RNN weight_hh_l0 layout (no transpose)
    b_ih_ref: (1, H)
    b_hh_ref: (1, H)
    w_fc_ref: (O, H)   PyTorch nn.Linear weight layout (no transpose)
    b_fc_ref: (1, O)
    out_ref:  (B, O)
    xw_ref:   (T*B, H) VMEM scratch holding the hoisted input projection
    """
    TB, _ = x_ref.shape
    B = out_ref.shape[0]
    T = TB // B

    # ---- Hoisted input projection: one MXU call for all timesteps ----------
    # Contract x's D axis with w_ih's dim 1 (PyTorch layout) via dot_general;
    # fold both RNN biases once.
    b = b_ih_ref[...] + b_hh_ref[...]                                  # (1, H)
    xw = lax.dot_general(x_ref[...], w_ih_ref[...],
                         (((1,), (1,)), ((), ())),
                         preferred_element_type=jnp.float32) + b       # (T*B, H)
    # Park in VMEM scratch: per-step reads become plain loads (slot with slack)
    # instead of sublane shuffles on the serial dependency chain.
    xw_ref[...] = xw

    w_hh = w_hh_ref[...]            # (H, H) PyTorch layout, read once

    # ---- Serial tanh recurrence (inherently sequential), static unroll -----
    # h0 == 0, so the first step is just tanh of the projected input.
    # TODO(synk): could hold W_hh in MXU weight registers across the unrolled
    # steps (pltpu.matmul_push_rhs / matmul_acc_lhs / matmul_pop) to shave the
    # per-step weight-load latency; kept jnp-level matmuls for robustness.
    h = jnp.tanh(xw_ref[pl.ds(0, B), :])                               # (B, H)
    for t in range(1, T):           # T is small & static: fully unrolled
        hw = lax.dot_general(h, w_hh, (((1,), (1,)), ((), ())),
                             preferred_element_type=jnp.float32)       # h @ W_hh^T
        h = jnp.tanh(xw_ref[pl.ds(t * B, B), :] + hw)
    # TODO(synk): if T grows, switch to lax.fori_loop(..., unroll=True) over
    # xw_ref to bound live ranges / code size.

    # ---- Final Linear on the last hidden state ------------------------------
    out = lax.dot_general(h, w_fc_ref[...], (((1,), (1,)), ((), ())),
                          preferred_element_type=jnp.float32) + b_fc_ref[...]
    # NOTE: output dtype follows the input dtype (a bf16 input down-casts here).
    out_ref[...] = out.astype(out_ref.dtype)


def rnn_forecast(x_btd, w_ih, w_hh, b_ih, b_hh, w_fc, b_fc):
    """x_btd: (B, T, D_in) batch_first, like the PyTorch module.
    Weights use PyTorch nn.RNN / nn.Linear conventions (passed through as-is):
      w_ih (H, D_in), w_hh (H, H), b_ih (H,), b_hh (H,), w_fc (O, H), b_fc (O,)
    Returns (B, O).
    """
    B, T, D = x_btd.shape
    H = w_hh.shape[0]
    O = w_fc.shape[0]

    # Wrapper-side time-major 2-D flatten of the activations (rows
    # [t0b0, t0b1, t1b0, ...]); the relayout is folded into input handling so
    # the kernel never reshapes (in-kernel reshapes are not views).
    x_tbd = jnp.transpose(x_btd, (1, 0, 2)).reshape(T * B, D)

    # Weights stay in PyTorch layout (no wrapper transposes). Bias reshapes to
    # 2-D are free layout changes.
    b_ih_r = b_ih.reshape(1, H)
    b_hh_r = b_hh.reshape(1, H)
    b_fc_r = b_fc.reshape(1, O)

    in_bytes = sum(int(a.size) * a.dtype.itemsize
                   for a in (x_tbd, w_ih, w_hh, b_ih_r, b_hh_r, w_fc, b_fc_r))
    out_bytes = B * O * x_btd.dtype.itemsize
    cost = pl.CostEstimate(
        flops=2 * T * B * D * H + 2 * (T - 1) * B * H * H + 2 * B * H * O,
        transcendentals=T * B * H,
        bytes_accessed=in_bytes + out_bytes,
    )

    # No grid: one invocation, all arrays VMEM-resident (default BlockSpec),
    # no per-step pipeline overhead, no double-buffered weight copies.
    return pl.pallas_call(
        rnn_forecast_kernel,
        out_shape=jax.ShapeDtypeStruct((B, O), x_btd.dtype),
        scratch_shapes=[pltpu.VMEM((T * B, H), jnp.float32)],
        cost_estimate=cost,
    )(x_tbd, w_ih, w_hh, b_ih_r, b_hh_r, w_fc, b_fc_r)


def rnn_forecast_ref(x_btd, w_ih, w_hh, b_ih, b_hh, w_fc, b_fc):
    """Pure-JAX reference mirroring torch nn.RNN(tanh) + Linear on last step."""
    B, T, D = x_btd.shape
    H = w_hh.shape[0]

    def step(h, x_t):
        h_new = jnp.tanh(x_t @ w_ih.T + b_ih + h @ w_hh.T + b_hh)
        return h_new, None

    h0 = jnp.zeros((B, H), jnp.float32)
    h_last, _ = jax.lax.scan(step, h0, jnp.transpose(x_btd, (1, 0, 2)))
    return h_last @ w_fc.T + b_fc


if __name__ == "__main__":
    # Small shapes implied by the module: seq model over feature vectors.
    B, T, D_in, H, O = 2, 8, 16, 32, 8

    key = jax.random.PRNGKey(0)
    kx, k1, k2, k3, k4, k5, k6 = jax.random.split(key, 7)

    x = jax.random.normal(kx, (B, T, D_in), dtype=jnp.float32)

    # Deterministic PyTorch-style uniform(-1/sqrt(H), 1/sqrt(H)) init.
    bound_rnn = 1.0 / jnp.sqrt(jnp.float32(H))
    bound_fc = 1.0 / jnp.sqrt(jnp.float32(H))
    w_ih = jax.random.uniform(k1, (H, D_in), jnp.float32, -bound_rnn, bound_rnn)
    w_hh = jax.random.uniform(k2, (H, H), jnp.float32, -bound_rnn, bound_rnn)
    b_ih = jax.random.uniform(k3, (H,), jnp.float32, -bound_rnn, bound_rnn)
    b_hh = jax.random.uniform(k4, (H,), jnp.float32, -bound_rnn, bound_rnn)
    w_fc = jax.random.uniform(k5, (O, H), jnp.float32, -bound_fc, bound_fc)
    b_fc = jax.random.uniform(k6, (O,), jnp.float32, -bound_fc, bound_fc)

    out = rnn_forecast(x, w_ih, w_hh, b_ih, b_hh, w_fc, b_fc)
    out = jax.block_until_ready(out)

    ref = rnn_forecast_ref(x, w_ih, w_hh, b_ih, b_hh, w_fc, b_fc)
    assert out.shape == (B, O)
    assert jnp.allclose(out, ref, atol=1e-5, rtol=1e-5), "mismatch vs JAX reference"

    print("KERNEL_OK")
</pallas_src>

<mosaic_0001>
module attributes {stable_mosaic.version = 11 : i64} {
  func.func @rnn_forecast_kernel(%arg0: memref<16x16xf32, #tpu.memory_space<vmem>>, %arg1: memref<32x16xf32, #tpu.memory_space<vmem>>, %arg2: memref<32x32xf32, #tpu.memory_space<vmem>>, %arg3: memref<1x32xf32, #tpu.memory_space<vmem>>, %arg4: memref<1x32xf32, #tpu.memory_space<vmem>>, %arg5: memref<8x32xf32, #tpu.memory_space<vmem>>, %arg6: memref<1x8xf32, #tpu.memory_space<vmem>>, %arg7: memref<2x8xf32, #tpu.memory_space<vmem>>, %arg8: memref<16x32xf32, #tpu.memory_space<vmem>>) attributes {dimension_semantics = [], scalar_prefetch = 0 : i64, scratch_operands = 1 : i64, tpu.core_type = #tpu.core_type<tc>} {
    %c0 = arith.constant 0 : index
    %c0_0 = arith.constant 0 : index
    %0 = vector.load %arg3[%c0, %c0_0] : memref<1x32xf32, #tpu.memory_space<vmem>>, vector<1x32xf32>
    %c0_1 = arith.constant 0 : index
    %c0_2 = arith.constant 0 : index
    %1 = vector.load %arg4[%c0_1, %c0_2] : memref<1x32xf32, #tpu.memory_space<vmem>>, vector<1x32xf32>
    %2 = arith.addf %0, %1 : vector<1x32xf32>
    %c0_3 = arith.constant 0 : index
    %c0_4 = arith.constant 0 : index
    %3 = vector.load %arg0[%c0_3, %c0_4] : memref<16x16xf32, #tpu.memory_space<vmem>>, vector<16x16xf32>
    %c0_5 = arith.constant 0 : index
    %c0_6 = arith.constant 0 : index
    %4 = vector.load %arg1[%c0_5, %c0_6] : memref<32x16xf32, #tpu.memory_space<vmem>>, vector<32x16xf32>
    %cst = arith.constant dense<0.000000e+00> : vector<16x32xf32>
    %5 = tpu.matmul %3, %4, %cst {dimension_numbers = #tpu.dot_dimension_numbers<[1], [1], [0], [0], [0, 0, 1, 0], [], []>} : vector<16x16xf32>, vector<32x16xf32>, vector<16x32xf32> -> vector<16x32xf32>
    %6 = vector.broadcast %2 : vector<1x32xf32> to vector<16x32xf32>
    %7 = arith.addf %5, %6 : vector<16x32xf32>
    %c0_7 = arith.constant 0 : index
    %c0_8 = arith.constant 0 : index
    %8 = vector.load %arg8[%c0_7, %c0_8] : memref<16x32xf32, #tpu.memory_space<vmem>>, vector<16x32xf32>
    tpu.vector_store %arg8[%c0_7, %c0_8], %7 {strides = array<i32>} : memref<16x32xf32, #tpu.memory_space<vmem>>, vector<16x32xf32>,
    %c0_9 = arith.constant 0 : index
    %c0_10 = arith.constant 0 : index
    %9 = vector.load %arg2[%c0_9, %c0_10] : memref<32x32xf32, #tpu.memory_space<vmem>>, vector<32x32xf32>
    %c0_11 = arith.constant 0 : index
    %c0_12 = arith.constant 0 : index
    %10 = vector.load %arg8[%c0_11, %c0_12] : memref<16x32xf32, #tpu.memory_space<vmem>>, vector<2x32xf32>
    %11 = math.tanh %10 : vector<2x32xf32>
    %cst_13 = arith.constant dense<0.000000e+00> : vector<2x32xf32>
    %12 = tpu.matmul %11, %9, %cst_13 {dimension_numbers = #tpu.dot_dimension_numbers<[1], [1], [0], [0], [0, 0, 1, 0], [], []>} : vector<2x32xf32>, vector<32x32xf32>, vector<2x32xf32> -> vector<2x32xf32>
    %c2 = arith.constant 2 : index
    %c0_14 = arith.constant 0 : index
    %13 = vector.load %arg8[%c2, %c0_14] : memref<16x32xf32, #tpu.memory_space<vmem>>, vector<2x32xf32>
    %14 = arith.addf %13, %12 : vector<2x32xf32>
    %15 = math.tanh %14 : vector<2x32xf32>
    %cst_15 = arith.constant dense<0.000000e+00> : vector<2x32xf32>
    %16 = tpu.matmul %15, %9, %cst_15 {dimension_numbers = #tpu.dot_dimension_numbers<[1], [1], [0], [0], [0, 0, 1, 0], [], []>} : vector<2x32xf32>, vector<32x32xf32>, vector<2x32xf32> -> vector<2x32xf32>
    %c4 = arith.constant 4 : index
    %c0_16 = arith.constant 0 : index
    %17 = vector.load %arg8[%c4, %c0_16] : memref<16x32xf32, #tpu.memory_space<vmem>>, vector<2x32xf32>
    %18 = arith.addf %17, %16 : vector<2x32xf32>
    %19 = math.tanh %18 : vector<2x32xf32>
    %cst_17 = arith.constant dense<0.000000e+00> : vector<2x32xf32>
    %20 = tpu.matmul %19, %9, %cst_17 {dimension_numbers = #tpu.dot_dimension_numbers<[1], [1], [0], [0], [0, 0, 1, 0], [], []>} : vector<2x32xf32>, vector<32x32xf32>, vector<2x32xf32> -> vector<2x32xf32>
    %c6 = arith.constant 6 : index
    %c0_18 = arith.constant 0 : index
    %21 = vector.load %arg8[%c6, %c0_18] : memref<16x32xf32, #tpu.memory_space<vmem>>, vector<2x32xf32>
    %22 = arith.addf %21, %20 : vector<2x32xf32>
    %23 = math.tanh %22 : vector<2x32xf32>
    %cst_19 = arith.constant dense<0.000000e+00> : vector<2x32xf32>
    %24 = tpu.matmul %23, %9, %cst_19 {dimension_numbers = #tpu.dot_dimension_numbers<[1], [1], [0], [0], [0, 0, 1, 0], [], []>} : vector<2x32xf32>, vector<32x32xf32>, vector<2x32xf32> -> vector<2x32xf32>
    %c8 = arith.constant 8 : index
    %c0_20 = arith.constant 0 : index
    %25 = vector.load %arg8[%c8, %c0_20] : memref<16x32xf32, #tpu.memory_space<vmem>>, vector<2x32xf32>
    %26 = arith.addf %25, %24 : vector<2x32xf32>
    %27 = math.tanh %26 : vector<2x32xf32>
    %cst_21 = arith.constant dense<0.000000e+00> : vector<2x32xf32>
    %28 = tpu.matmul %27, %9, %cst_21 {dimension_numbers = #tpu.dot_dimension_numbers<[1], [1], [0], [0], [0, 0, 1, 0], [], []>} : vector<2x32xf32>, vector<32x32xf32>, vector<2x32xf32> -> vector<2x32xf32>
    %c10 = arith.constant 10 : index
    %c0_22 = arith.constant 0 : index
    %29 = vector.load %arg8[%c10, %c0_22] : memref<16x32xf32, #tpu.memory_space<vmem>>, vector<2x32xf32>
    %30 = arith.addf %29, %28 : vector<2x32xf32>
    %31 = math.tanh %30 : vector<2x32xf32>
    %cst_23 = arith.constant dense<0.000000e+00> : vector<2x32xf32>
    %32 = tpu.matmul %31, %9, %cst_23 {dimension_numbers = #tpu.dot_dimension_numbers<[1], [1], [0], [0], [0, 0, 1, 0], [], []>} : vector<2x32xf32>, vector<32x32xf32>, vector<2x32xf32> -> vector<2x32xf32>
    %c12 = arith.constant 12 : index
    %c0_24 = arith.constant 0 : index
    %33 = vector.load %arg8[%c12, %c0_24] : memref<16x32xf32, #tpu.memory_space<vmem>>, vector<2x32xf32>
    %34 = arith.addf %33, %32 : vector<2x32xf32>
    %35 = math.tanh %34 : vector<2x32xf32>
    %cst_25 = arith.constant dense<0.000000e+00> : vector<2x32xf32>
    %36 = tpu.matmul %35, %9, %cst_25 {dimension_numbers = #tpu.dot_dimension_numbers<[1], [1], [0], [0], [0, 0, 1, 0], [], []>} : vector<2x32xf32>, vector<32x32xf32>, vector<2x32xf32> -> vector<2x32xf32>
    %c14 = arith.constant 14 : index
    %c0_26 = arith.constant 0 : index
    %37 = vector.load %arg8[%c14, %c0_26] : memref<16x32xf32, #tpu.memory_space<vmem>>, vector<2x32xf32>
    %38 = arith.addf %37, %36 : vector<2x32xf32>
    %39 = math.tanh %38 : vector<2x32xf32>
    %c0_27 = arith.constant 0 : index
    %c0_28 = arith.constant 0 : index
    %40 = vector.load %arg5[%c0_27, %c0_28] : memref<8x32xf32, #tpu.memory_space<vmem>>, vector<8x32xf32>
    %cst_29 = arith.constant dense<0.000000e+00> : vector<2x8xf32>
    %41 = tpu.matmul %39, %40, %cst_29 {dimension_numbers = #tpu.dot_dimension_numbers<[1], [1], [0], [0], [0, 0, 1, 0], [], []>} : vector<2x32xf32>, vector<8x32xf32>, vector<2x8xf32> -> vector<2x8xf32>
    %c0_30 = arith.constant 0 : index
    %c0_31 = arith.constant 0 : index
    %42 = vector.load %arg6[%c0_30, %c0_31] : memref<1x8xf32, #tpu.memory_space<vmem>>, vector<1x8xf32>
    %43 = vector.broadcast %42 : vector<1x8xf32> to vector<2x8xf32>
    %44 = arith.addf %41, %43 : vector<2x8xf32>
    %c0_32 = arith.constant 0 : index
    %c0_33 = arith.constant 0 : index
    %45 = vector.load %arg7[%c0_32, %c0_33] : memref<2x8xf32, #tpu.memory_space<vmem>>, vector<2x8xf32>
    tpu.vector_store %arg7[%c0_32, %c0_33], %44 {strides = array<i32>} : memref<2x8xf32, #tpu.memory_space<vmem>>, vector<2x8xf32>,
    return
  }
}

</mosaic_0001>

<llo_original>
// kernel: tpu_custom_call.1
$region0: #{tpu_custom_call.1}
  #allocation0 [shape = 'u32[]', space=smem, size = 0x4, offset = 0x4, fixed_abs, tag = 'smem constant byte address 0x4 - core index']
  #allocation1 [shape = 'u32[72,128]{1,0:T(1,128)}', space=vmem, size = 0x9000, scoped, tag = 'internal scratch']
  #allocation2 [shape = 'f32[16,32]{1,0:T(8,128)}', space=vmem, size = 0x2000, scoped, tag = 'scratch operand']
  %s0 = inlined_call_operand.vmem [shape: f32[16,16], index: 0, kind: input, shape index: {}]
  %s1 = inlined_call_operand.vmem [shape: f32[32,16], index: 1, kind: input, shape index: {}]
  %s2 = inlined_call_operand.vmem [shape: f32[32,32], index: 2, kind: input, shape index: {}]
  %s3 = inlined_call_operand.vmem [shape: f32[1,32], index: 3, kind: input, shape index: {}]
  %s4 = inlined_call_operand.vmem [shape: f32[1,32], index: 4, kind: input, shape index: {}]
  %s5 = inlined_call_operand.hbm [shape: f32[8,32], index: 5, kind: input, shape index: {}]
  %s6 = inlined_call_operand.vmem [shape: f32[1,8], index: 6, kind: input, shape index: {}]
  %s7 = inlined_call_operand.hbm [shape: f32[2,8], index: 7, kind: output, shape index: {}]
  %s8 = sld [smem:[#allocation0]]
  $region42: #{tpu_custom_call.1} parent=0
    _
  %s10 = ssub.s32 1, %s8
  %s11 = scalar_select 0, %s10, %s8
  $region1: #{tpu_custom_call.1} parent=0
    #allocation3 [shape = 'u8[4096]{0}', space=vmem, size = 0x1000, scoped, tag = 'input window, operand 5, single buffered']
    #allocation4 [shape = 's32[1]{0}', space=sflag, size = 0x4, scoped, tag = 'scoped memory for tpu_custom_call.1']
    #allocation5 [shape = 's32[1]{0}', space=sflag, size = 0x4, scoped, tag = 'scoped memory for tpu_custom_call.1']
    #allocation6 [shape = 'u8[1024]{0}', space=vmem, size = 0x400, scoped, tag = 'output window, operand 0, single buffered']
    %12 = vsyncpa [#allocation4], 0
    %13 = vsyncpa [#allocation5], 0
    // Predicated region
    $region2: #{tpu_custom_call.1} parent=1 // pred_check
      _
    $region3: #{tpu_custom_call.1} parent=1 // pred_check_branch
      %15 = sbr.rel (0) target = $region5
    $region4: #{tpu_custom_call.1} parent=1 // pred_region
      _
    $region5: #{tpu_custom_call.1} parent=1 // pred_fallthru
      _
    // Predicated region
    $region6: #{tpu_custom_call.1} parent=1 // pred_check
      _
    $region7: #{tpu_custom_call.1} parent=1 // pred_check_branch
      %17 = sbr.rel (0) target = $region9
    $region8: #{tpu_custom_call.1} parent=1 // pred_region
      _
    $region9: #{tpu_custom_call.1} parent=1 // pred_fallthru
      _
    // Predicated region
    $region10: #{tpu_custom_call.1} parent=1 // pred_check
      _
    $region11: #{tpu_custom_call.1} parent=1 // pred_check_branch
      %19 = sbr.rel (0) target = $region13
    $region12: #{tpu_custom_call.1} parent=1 // pred_region
      _
    $region13: #{tpu_custom_call.1} parent=1 // pred_fallthru
      _
    // Predicated region
    $region14: #{tpu_custom_call.1} parent=1 // pred_check
      _
    $region15: #{tpu_custom_call.1} parent=1 // pred_check_branch
      %21 = sbr.rel (0) target = $region17
    $region16: #{tpu_custom_call.1} parent=1 // pred_region
      _
    $region17: #{tpu_custom_call.1} parent=1 // pred_fallthru
      _
    // Predicated region
    $region18: #{tpu_custom_call.1} parent=1 // pred_check
      _
    $region19: #{tpu_custom_call.1} parent=1 // pred_check_branch
      %23 = sbr.rel (0) target = $region21
    $region20: #{tpu_custom_call.1} parent=1 // pred_region
      _
    $region21: #{tpu_custom_call.1} parent=1 // pred_fallthru
      _
    // Predicated region
    $region22: #{tpu_custom_call.1} parent=1 // pred_check
      _
    $region23: #{tpu_custom_call.1} parent=1 // pred_check_branch
      %25 = sbr.rel (0) target = $region25
    $region24: #{tpu_custom_call.1} parent=1 // pred_region
      %27 = vsyncadd [#allocation4], 0
      %s29 = sshll.u32 %s5, 4
      %s30 = int_to_ptr.hbm [resolvable:$true] %s29
      %s31 = sshll.u32 [#allocation3], 4
      %s32 = int_to_ptr.vmem [resolvable:$true] %s31
      %34 = dma.hbm_to_vmem [thread:$0]  %s30, 128, %s32, [#allocation4]
    $region25: #{tpu_custom_call.1} parent=1 // pred_fallthru
      _
    // Predicated region
    $region26: #{tpu_custom_call.1} parent=1 // pred_check
      _
    $region27: #{tpu_custom_call.1} parent=1 // pred_check_branch
      %36 = sbr.rel (0) target = $region29
    $region28: #{tpu_custom_call.1} parent=1 // pred_region
      _
    $region29: #{tpu_custom_call.1} parent=1 // pred_fallthru
      _
    // Predicated region
    $region30: #{tpu_custom_call.1} parent=1 // pred_check
      _
    $region31: #{tpu_custom_call.1} parent=1 // pred_check_branch
      %38 = sbr.rel (0) target = $region33
    $region32: #{tpu_custom_call.1} parent=1 // pred_region
      %40 = dma.done [#allocation4], 128
    $region33: #{tpu_custom_call.1} parent=1 // pred_fallthru
      _
    %v41 = vld [vmem:[%s3] sm:$0x1]
    %v42 = vld [vmem:[%s4] sm:$0x1]
    %v43 = vadd.f32 %v41, %v42
    %v44 = vld [vmem:[%s0] sm:$0xff]
    %v45 = vld [vmem:[%s0 + $0x8] sm:$0xff]
    %v46 = vld [vmem:[%s1] sm:$0xff]
    %v47 = vld [vmem:[%s1 + $0x8] sm:$0xff]
    %v48 = vld [vmem:[%s1 + $0x10] sm:$0xff]
    %v49 = vld [vmem:[%s1 + $0x18] sm:$0xff]
    %v51 = vperm.slane %v43, 0
    %vm53 = vcmask 130048
    %v55 = vsel %vm53, %v44, 0
    %v58 = vsel %vm53, %v45, 0
    %v61 = vsel %vm53, %v46, 0
    %v64 = vsel %vm53, %v47, 0
    %v67 = vsel %vm53, %v48, 0
    %v70 = vsel %vm53, %v49, 0
    %72 = vmatpush.xpose.msra.mxu0 0.0
    %73 = vmatpush.xpose.msra.mxu0 0.0
    %74 = vmatpush.xpose.msra.mxu0 0.0
    %75 = vmatpush.xpose.msra.mxu0 0.0
    %76 = vmatpush.xpose.msra.mxu0 0.0
    %77 = vmatpush.xpose.msra.mxu0 0.0
    %78 = vmatpush.xpose.msra.mxu0 0.0
    %79 = vmatpush.xpose.msra.mxu0 0.0
    %80 = vmatpush.xpose.msra.mxu0 0.0
    %81 = vmatpush.xpose.msra.mxu0 0.0
    %82 = vmatpush.xpose.msra.mxu0 0.0
    %83 = vmatpush.xpose.msra.mxu0 0.0
    %84 = vmatpush.xpose.msra.mxu0 %v70
    %85 = vmatpush.xpose.msra.mxu0 %v67
    %86 = vmatpush.xpose.msra.mxu0 %v64
    %87 = vmatpush.xpose.msra.mxu0 %v61
    %88 = vmatmul.f32.gmra.mxu0 %v55
    %v89 = vpop.f32.mrf.mxu0
    %v90 = vadd.f32 %v51, %v89
    %91 = vmatmul.f32.gmra.mxu0 %v58
    %v92 = vpop.f32.mrf.mxu0
    %v93 = vadd.f32 %v51, %v92
    %94 = vdwg.mxu0
    %vm95 = vcmask 261120
    %96 = vst.msk [vmem:[#allocation2] sm:$0xff] %vm95, %v90
    %97 = vst.msk [vmem:[#allocation2 + $0x8] sm:$0xff] %vm95, %v93
    %v98 = vld [vmem:[%s2] sm:$0xff]
    %v99 = vld [vmem:[%s2 + $0x8] sm:$0xff]
    %v100 = vld [vmem:[%s2 + $0x10] sm:$0xff]
    %v101 = vld [vmem:[%s2 + $0x18] sm:$0xff]
    %v102 = vld [vmem:[#allocation2] sm:$0x3]
    %v103 = vtanh.pop %v102
    %v105 = vsel %vm95, %v103, 0
    %v108 = vsel %vm95, %v98, 0
    %v111 = vsel %vm95, %v99, 0
    %v114 = vsel %vm95, %v100, 0
    %v117 = vsel %vm95, %v101, 0
    %119 = vmatpush.xpose.msra.mxu0 0.0
    %120 = vmatpush.xpose.msra.mxu0 0.0
    %121 = vmatpush.xpose.msra.mxu0 0.0
    %122 = vmatpush.xpose.msra.mxu0 0.0
    %123 = vmatpush.xpose.msra.mxu0 0.0
    %124 = vmatpush.xpose.msra.mxu0 0.0
    %125 = vmatpush.xpose.msra.mxu0 0.0
    %126 = vmatpush.xpose.msra.mxu0 0.0
    %127 = vmatpush.xpose.msra.mxu0 0.0
    %128 = vmatpush.xpose.msra.mxu0 0.0
    %129 = vmatpush.xpose.msra.mxu0 0.0
    %130 = vmatpush.xpose.msra.mxu0 0.0
    %131 = vmatpush.xpose.msra.mxu0 %v117
    %132 = vmatpush.xpose.msra.mxu0 %v114
    %133 = vmatpush.xpose.msra.mxu0 %v111
    %134 = vmatpush.xpose.msra.mxu0 %v108
    %135 = vmatmul.f32.gmra.mxu0 %v105
    %v136 = vpop.f32.mrf.mxu0
    %v137 = vadd.f32 0.0, %v136
    %138 = vdwg.mxu0
    %v139 = vld [vmem:[#allocation2 + $0x2] sm:$0x3]
    %v140 = vadd.f32 %v139, %v137
    %v141 = vtanh.pop %v140
    %v143 = vsel %vm95, %v141, 0
    %145 = vmatpush.xpose.msra.mxu0 0.0
    %146 = vmatpush.xpose.msra.mxu0 0.0
    %147 = vmatpush.xpose.msra.mxu0 0.0
    %148 = vmatpush.xpose.msra.mxu0 0.0
    %149 = vmatpush.xpose.msra.mxu0 0.0
    %150 = vmatpush.xpose.msra.mxu0 0.0
    %151 = vmatpush.xpose.msra.mxu0 0.0
    %152 = vmatpush.xpose.msra.mxu0 0.0
    %153 = vmatpush.xpose.msra.mxu0 0.0
    %154 = vmatpush.xpose.msra.mxu0 0.0
    %155 = vmatpush.xpose.msra.mxu0 0.0
    %156 = vmatpush.xpose.msra.mxu0 0.0
    %157 = vmatpush.xpose.msra.mxu0 %v117
    %158 = vmatpush.xpose.msra.mxu0 %v114
    %159 = vmatpush.xpose.msra.mxu0 %v111
    %160 = vmatpush.xpose.msra.mxu0 %v108
    %161 = vmatmul.f32.gmra.mxu0 %v143
    %v162 = vpop.f32.mrf.mxu0
    %v163 = vadd.f32 0.0, %v162
    %164 = vdwg.mxu0
    %v165 = vld [vmem:[#allocation2 + $0x4] sm:$0x3]
    %v166 = vadd.f32 %v165, %v163
    %v167 = vtanh.pop %v166
    %v169 = vsel %vm95, %v167, 0
    %171 = vmatpush.xpose.msra.mxu0 0.0
    %172 = vmatpush.xpose.msra.mxu0 0.0
    %173 = vmatpush.xpose.msra.mxu0 0.0
    %174 = vmatpush.xpose.msra.mxu0 0.0
    %175 = vmatpush.xpose.msra.mxu0 0.0
    %176 = vmatpush.xpose.msra.mxu0 0.0
    %177 = vmatpush.xpose.msra.mxu0 0.0
    %178 = vmatpush.xpose.msra.mxu0 0.0
    %179 = vmatpush.xpose.msra.mxu0 0.0
    %180 = vmatpush.xpose.msra.mxu0 0.0
    %181 = vmatpush.xpose.msra.mxu0 0.0
    %182 = vmatpush.xpose.msra.mxu0 0.0
    %183 = vmatpush.xpose.msra.mxu0 %v117
    %184 = vmatpush.xpose.msra.mxu0 %v114
    %185 = vmatpush.xpose.msra.mxu0 %v111
    %186 = vmatpush.xpose.msra.mxu0 %v108
    %187 = vmatmul.f32.gmra.mxu0 %v169
    %v188 = vpop.f32.mrf.mxu0
    %v189 = vadd.f32 0.0, %v188
    %190 = vdwg.mxu0
    %v191 = vld [vmem:[#allocation2 + $0x6] sm:$0x3]
    %v192 = vadd.f32 %v191, %v189
    %v193 = vtanh.pop %v192
    %v195 = vsel %vm95, %v193, 0
    %197 = vmatpush.xpose.msra.mxu0 0.0
    %198 = vmatpush.xpose.msra.mxu0 0.0
    %199 = vmatpush.xpose.msra.mxu0 0.0
    %200 = vmatpush.xpose.msra.mxu0 0.0
    %201 = vmatpush.xpose.msra.mxu0 0.0
    %202 = vmatpush.xpose.msra.mxu0 0.0
    %203 = vmatpush.xpose.msra.mxu0 0.0
    %204 = vmatpush.xpose.msra.mxu0 0.0
    %205 = vmatpush.xpose.msra.mxu0 0.0
    %206 = vmatpush.xpose.msra.mxu0 0.0
    %207 = vmatpush.xpose.msra.mxu0 0.0
    %208 = vmatpush.xpose.msra.mxu0 0.0
    %209 = vmatpush.xpose.msra.mxu0 %v117
    %210 = vmatpush.xpose.msra.mxu0 %v114
    %211 = vmatpush.xpose.msra.mxu0 %v111
    %212 = vmatpush.xpose.msra.mxu0 %v108
    %213 = vmatmul.f32.gmra.mxu0 %v195
    %v214 = vpop.f32.mrf.mxu0
    %v215 = vadd.f32 0.0, %v214
    %216 = vdwg.mxu0
    %v217 = vld [vmem:[#allocation2 + $0x8] sm:$0x3]
    %v218 = vadd.f32 %v217, %v215
    %v219 = vtanh.pop %v218
    %v221 = vsel %vm95, %v219, 0
    %223 = vmatpush.xpose.msra.mxu0 0.0
    %224 = vmatpush.xpose.msra.mxu0 0.0
    %225 = vmatpush.xpose.msra.mxu0 0.0
    %226 = vmatpush.xpose.msra.mxu0 0.0
    %227 = vmatpush.xpose.msra.mxu0 0.0
    %228 = vmatpush.xpose.msra.mxu0 0.0
    %229 = vmatpush.xpose.msra.mxu0 0.0
    %230 = vmatpush.xpose.msra.mxu0 0.0
    %231 = vmatpush.xpose.msra.mxu0 0.0
    %232 = vmatpush.xpose.msra.mxu0 0.0
    %233 = vmatpush.xpose.msra.mxu0 0.0
    %234 = vmatpush.xpose.msra.mxu0 0.0
    %235 = vmatpush.xpose.msra.mxu0 %v117
    %236 = vmatpush.xpose.msra.mxu0 %v114
    %237 = vmatpush.xpose.msra.mxu0 %v111
    %238 = vmatpush.xpose.msra.mxu0 %v108
    %239 = vmatmul.f32.gmra.mxu0 %v221
    %v240 = vpop.f32.mrf.mxu0
    %v241 = vadd.f32 0.0, %v240
    %242 = vdwg.mxu0
    %v243 = vld [vmem:[#allocation2 + $0xa] sm:$0x3]
    %v244 = vadd.f32 %v243, %v241
    %v245 = vtanh.pop %v244
    %v247 = vsel %vm95, %v245, 0
    %249 = vmatpush.xpose.msra.mxu0 0.0
    %250 = vmatpush.xpose.msra.mxu0 0.0
    %251 = vmatpush.xpose.msra.mxu0 0.0
    %252 = vmatpush.xpose.msra.mxu0 0.0
    %253 = vmatpush.xpose.msra.mxu0 0.0
    %254 = vmatpush.xpose.msra.mxu0 0.0
    %255 = vmatpush.xpose.msra.mxu0 0.0
    %256 = vmatpush.xpose.msra.mxu0 0.0
    %257 = vmatpush.xpose.msra.mxu0 0.0
    %258 = vmatpush.xpose.msra.mxu0 0.0
    %259 = vmatpush.xpose.msra.mxu0 0.0
    %260 = vmatpush.xpose.msra.mxu0 0.0
    %261 = vmatpush.xpose.msra.mxu0 %v117
    %262 = vmatpush.xpose.msra.mxu0 %v114
    %263 = vmatpush.xpose.msra.mxu0 %v111
    %264 = vmatpush.xpose.msra.mxu0 %v108
    %265 = vmatmul.f32.gmra.mxu0 %v247
    %v266 = vpop.f32.mrf.mxu0
    %v267 = vadd.f32 0.0, %v266
    %268 = vdwg.mxu0
    %v269 = vld [vmem:[#allocation2 + $0xc] sm:$0x3]
    %v270 = vadd.f32 %v269, %v267
    %v271 = vtanh.pop %v270
    %v273 = vsel %vm95, %v271, 0
    %275 = vmatpush.xpose.msra.mxu0 0.0
    %276 = vmatpush.xpose.msra.mxu0 0.0
    %277 = vmatpush.xpose.msra.mxu0 0.0
    %278 = vmatpush.xpose.msra.mxu0 0.0
    %279 = vmatpush.xpose.msra.mxu0 0.0
    %280 = vmatpush.xpose.msra.mxu0 0.0
    %281 = vmatpush.xpose.msra.mxu0 0.0
    %282 = vmatpush.xpose.msra.mxu0 0.0
    %283 = vmatpush.xpose.msra.mxu0 0.0
    %284 = vmatpush.xpose.msra.mxu0 0.0
    %285 = vmatpush.xpose.msra.mxu0 0.0
    %286 = vmatpush.xpose.msra.mxu0 0.0
    %287 = vmatpush.xpose.msra.mxu0 %v117
    %288 = vmatpush.xpose.msra.mxu0 %v114
    %289 = vmatpush.xpose.msra.mxu0 %v111
    %290 = vmatpush.xpose.msra.mxu0 %v108
    %291 = vmatmul.f32.gmra.mxu0 %v273
    %v292 = vpop.f32.mrf.mxu0
    %v293 = vadd.f32 0.0, %v292
    %294 = vdwg.mxu0
    %v295 = vld [vmem:[#allocation2 + $0xe] sm:$0x3]
    %v296 = vadd.f32 %v295, %v293
    %v297 = vtanh.pop %v296
    %v298 = vld [vmem:[#allocation3] sm:$0xff]
    %v299 = vld [vmem:[%s6] sm:$0x1]
    %v301 = vperm.slane %v299, 0
    %v304 = vsel %vm95, %v297, 0
    %v307 = vsel %vm95, %v298, 0
    %309 = vmatpush.xpose.msra.mxu0 0.0
    %310 = vmatpush.xpose.msra.mxu0 0.0
    %311 = vmatpush.xpose.msra.mxu0 0.0
    %312 = vmatpush.xpose.msra.mxu0 0.0
    %313 = vmatpush.xpose.msra.mxu0 0.0
    %314 = vmatpush.xpose.msra.mxu0 0.0
    %315 = vmatpush.xpose.msra.mxu0 0.0
    %316 = vmatpush.xpose.msra.mxu0 0.0
    %317 = vmatpush.xpose.msra.mxu0 0.0
    %318 = vmatpush.xpose.msra.mxu0 0.0
    %319 = vmatpush.xpose.msra.mxu0 0.0
    %320 = vmatpush.xpose.msra.mxu0 0.0
    %321 = vmatpush.xpose.msra.mxu0 0.0
    %322 = vmatpush.xpose.msra.mxu0 0.0
    %323 = vmatpush.xpose.msra.mxu0 0.0
    %324 = vmatpush.xpose.msra.mxu0 %v307
    %325 = vmatmul.f32.gmra.mxu0 %v304
    %v326 = vpop.f32.mrf.mxu0
    %v327 = vadd.f32 %v301, %v326
    %328 = vdwg.mxu0
    %vm329 = vcmask 58368
    %330 = vst.msk [vmem:[#allocation6] sm:$0x3] %vm329, %v327
    // Predicated region
    $region34: #{tpu_custom_call.1} parent=1 // pred_check
      _
    $region35: #{tpu_custom_call.1} parent=1 // pred_check_branch
      %332 = sbr.rel (0) target = $region37
    $region36: #{tpu_custom_call.1} parent=1 // pred_region
      %334 = vsyncadd [#allocation5], 0
      %s336 = sshll.u32 [#allocation6], 4
      %s337 = int_to_ptr.vmem [resolvable:$true] %s336
      %s338 = sshll.u32 %s7, 4
      %s339 = int_to_ptr.hbm [resolvable:$true] %s338
      %341 = dma.vmem_to_hbm [thread:$0]  %s337, 32, %s339, [#allocation5]
    $region37: #{tpu_custom_call.1} parent=1 // pred_fallthru
      _
    // Predicated region
    $region38: #{tpu_custom_call.1} parent=1 // pred_check
      _
    $region39: #{tpu_custom_call.1} parent=1 // pred_check_branch
      %343 = sbr.rel (0) target = $region41
    $region40: #{tpu_custom_call.1} parent=1 // pred_region
      %345 = dma.done [#allocation5], 32
    $region41: #{tpu_custom_call.1} parent=1 // pred_fallthru
      _
    %346 = vsyncpa [#allocation4], 1
    %347 = vsyncpa [#allocation5], 1

</llo_original>
